<compile_context>
chip_gen: v5e
topology: v5e:2x2
jax: 0.10.0
libtpu: 0.0.40
codegen_flags: <defaults>
</compile_context>

<pallas_src>
import functools

import jax
import jax.numpy as jnp
from jax import lax
from jax.experimental import pallas as pl
from jax.experimental.pallas import tpu as pltpu


def _unit_rows(x32, eps=1e-12):
    """Row-wise unit normalization in f32 (clamped, ~CosineSimilarity eps)."""
    sq = jnp.sum(x32 * x32, axis=-1, keepdims=True)
    return x32 * lax.rsqrt(jnp.maximum(sq, eps))


def _simclr_kernel(qi_ref, qj_ref, ki_ref, kj_ref, pos_ref,   # inputs
                   li_ref, lj_ref,                            # per-row losses
                   *, tm, tn):
    ri = pl.program_id(0)
    cj = pl.program_id(1)

    @pl.when(cj == 0)
    def _init():
        li_ref[...] = jnp.zeros_like(li_ref)
        lj_ref[...] = jnp.zeros_like(lj_ref)

    # A @ B.T on the MXU: bf16 operands, f32 accumulation.
    dn = (((1,), (1,)), ((), ()))
    s_ii = lax.dot_general(qi_ref[...], ki_ref[...], dn,
                           preferred_element_type=jnp.float32)
    s_ij = lax.dot_general(qi_ref[...], kj_ref[...], dn,
                           preferred_element_type=jnp.float32)
    s_ji = lax.dot_general(qj_ref[...], ki_ref[...], dn,
                           preferred_element_type=jnp.float32)
    s_jj = lax.dot_general(qj_ref[...], kj_ref[...], dn,
                           preferred_element_type=jnp.float32)

    # |sim| <= 1/temperature after cosine normalization, so exp cannot overflow
    # for sane temperatures.
    # TODO(synk): subtract a per-row running max before exp if temperatures
    #             below ~0.02 ever become relevant.
    ei = jnp.exp(s_ii) + jnp.exp(s_ij)        # (tm, tn) f32, view-i rows
    ej = jnp.exp(s_ji) + jnp.exp(s_jj)        # (tm, tn) f32, view-j rows

    li_ref[...] += jnp.sum(ei, axis=-1, keepdims=True)
    lj_ref[...] += jnp.sum(ej, axis=-1, keepdims=True)

    # Remove the self-pair and positive-pair contributions exactly as they
    # were accumulated, only on grid steps whose row/col tiles intersect the
    # global diagonal (diag of ei = self(i) + pos(i); diag of ej = pos(j) + self(j)).
    row0 = ri * tm
    col0 = cj * tn
    has_diag = jnp.logical_and(row0 < col0 + tn, col0 < row0 + tm)

    @pl.when(has_diag)
    def _remove_diag():
        r = lax.broadcasted_iota(jnp.int32, (tm, tn), 0) + row0
        c = lax.broadcasted_iota(jnp.int32, (tm, tn), 1) + col0
        d = r == c
        li_ref[...] -= jnp.sum(jnp.where(d, ei, 0.0), axis=-1, keepdims=True)
        lj_ref[...] -= jnp.sum(jnp.where(d, ej, 0.0), axis=-1, keepdims=True)

    @pl.when(cj == pl.num_programs(1) - 1)
    def _finalize():
        pos = pos_ref[...]                      # (tm, 1) f32, already / T
        # -log(exp(pos) / (neg + 1e-5)) == log(neg + 1e-5) - pos
        li_ref[...] = jnp.log(li_ref[...] + 1e-5) - pos
        lj_ref[...] = jnp.log(lj_ref[...] + 1e-5) - pos


def _pick_tile(dim: int, target: int, align: int) -> int:
    """Largest tile <= target dividing dim, preferring `align`-multiples,
    then 8-multiples, then the full dim (full blocks are always layout-legal)."""
    if dim <= target:
        return dim
    for a in (align, 8):
        t = (min(target, dim) // a) * a
        while t >= a:
            if dim % t == 0:
                return t
            t -= a
    return dim  # TODO(synk): awkward dims fall back to an untiled axis.


def simclr_loss(z_i, z_j, temperature: float = 0.5,
                row_tile: int = 512, col_tile: int = 512,
                mxu_dtype=jnp.bfloat16):
    """SimCLR loss for two views z_i, z_j of shape (B, D)."""
    B, D = z_i.shape
    assert z_j.shape == (B, D)
    inv_t = 1.0 / float(temperature)

    # ---- wrapper-side preprocessing (once, in f32) ------------------------
    ni = _unit_rows(z_i.astype(jnp.float32))
    nj = _unit_rows(z_j.astype(jnp.float32))
    pos = jnp.sum(ni * nj, axis=-1, keepdims=True) * inv_t      # (B, 1) f32
    ki = ni.astype(mxu_dtype)                   # keys: unit rows
    kj = nj.astype(mxu_dtype)
    qi = (ni * inv_t).astype(mxu_dtype)         # queries: 1/T folded in
    qj = (nj * inv_t).astype(mxu_dtype)

    # ---- generation-aware VMEM limit and tile ceilings --------------------
    try:
        vmem_cap = int(pltpu.get_tpu_info().vmem_capacity_bytes)
    except Exception:
        vmem_cap = 64 * 1024 * 1024             # conservative (v7x-sized) fallback
    vmem_limit = min(int(vmem_cap * 0.75), 100 * 1024 * 1024)

    row_target = min(row_tile, B)
    if B >= 256:
        row_target = min(row_target, B // 2)    # >=2 row tiles -> v7x 2-TC sharding
    col_target = min(col_tile, B)

    itemsize = jnp.dtype(mxu_dtype).itemsize

    def footprint(tm, tn):
        inputs = 2 * 2 * (tm + tn) * D * itemsize + 2 * tm * 4   # double-buffered
        outputs = 2 * 2 * tm * 4
        temps = 10 * tm * tn * 4                                 # f32 sims + exps
        return inputs + outputs + temps

    budget = int(vmem_limit * 0.6)
    while footprint(row_target, col_target) > budget and col_target > 128:
        col_target //= 2
    while footprint(row_target, col_target) > budget and row_target > 128:
        row_target //= 2

    tm = _pick_tile(B, row_target, 16)          # bf16 sublane alignment
    tn = _pick_tile(B, col_target, 128)         # lane alignment of (tm, tn) tiles

    kernel = functools.partial(_simclr_kernel, tm=tm, tn=tn)
    loss_i, loss_j = pl.pallas_call(
        kernel,
        out_shape=(jax.ShapeDtypeStruct((B, 1), jnp.float32),
                   jax.ShapeDtypeStruct((B, 1), jnp.float32)),
        grid_spec=pltpu.PrefetchScalarGridSpec(
            num_scalar_prefetch=0,
            grid=(B // tm, B // tn),            # (row tiles, column/reduction tiles)
            in_specs=[
                pl.BlockSpec((tm, D), lambda ri, cj: (ri, 0)),   # q_i (scaled)
                pl.BlockSpec((tm, D), lambda ri, cj: (ri, 0)),   # q_j (scaled)
                pl.BlockSpec((tn, D), lambda ri, cj: (cj, 0)),   # k_i (unit)
                pl.BlockSpec((tn, D), lambda ri, cj: (cj, 0)),   # k_j (unit)
                pl.BlockSpec((tm, 1), lambda ri, cj: (ri, 0)),   # pos (f32)
            ],
            out_specs=[
                pl.BlockSpec((tm, 1), lambda ri, cj: (ri, 0)),
                pl.BlockSpec((tm, 1), lambda ri, cj: (ri, 0)),
            ]),
        compiler_params=pltpu.CompilerParams(
            dimension_semantics=("parallel", "arbitrary"),
            vmem_limit_bytes=vmem_limit),
    )(qi, qj, ki, kj, pos)

    # Logical rows 0..B-1 -> loss_i, rows B..2B-1 -> loss_j; mean over 2B rows.
    return (jnp.sum(loss_i) + jnp.sum(loss_j)) / (2.0 * B)


def simclr_loss_ref(z_i, z_j, temperature: float = 0.5):
    """Pure-JAX reference mirroring the PyTorch forward (masked formulation)."""
    z = jnp.concatenate([z_i, z_j], axis=0).astype(jnp.float32)
    N = z.shape[0]
    Bh = N // 2
    norm = jnp.sqrt(jnp.sum(z * z, axis=-1, keepdims=True))
    sim = (z @ z.T) / jnp.maximum(norm * norm.T, 1e-8) / temperature
    idx = jnp.arange(N)
    pos_col = (idx + Bh) % N
    pos_val = sim[idx, pos_col][:, None]
    neg_mask = (idx[:, None] != idx[None, :]) & (idx[None, :] != pos_col[:, None])
    neg_sum = jnp.sum(jnp.where(neg_mask, jnp.exp(sim), 0.0), axis=1, keepdims=True)
    losses = -jnp.log(jnp.exp(pos_val) / (neg_sum + 1e-5))
    return jnp.mean(losses)


if __name__ == "__main__":
    key = jax.random.PRNGKey(0)
    k1, k2, k3, k4 = jax.random.split(key, 4)

    # --- small shapes consistent with the module: batch=4, hidden=32 (grid (1,1))
    B, D = 4, 32
    z_i = jax.random.normal(k1, (B, D), dtype=jnp.float32)
    z_j = jax.random.normal(k2, (B, D), dtype=jnp.float32)
    loss = simclr_loss(z_i, z_j, temperature=0.5)
    jax.block_until_ready(loss)
    ref = simclr_loss_ref(z_i, z_j, temperature=0.5)
    assert jnp.allclose(loss, ref, atol=1e-2, rtol=1e-2), (loss, ref)

    # --- tiled multi-step path with explicit tiles: grid = (2, 2)
    B2, D2 = 256, 128
    z_i2 = jax.random.normal(k3, (B2, D2), dtype=jnp.float32)
    z_j2 = jax.random.normal(k4, (B2, D2), dtype=jnp.float32)
    ref2 = simclr_loss_ref(z_i2, z_j2, temperature=0.5)
    loss2 = simclr_loss(z_i2, z_j2, temperature=0.5, row_tile=128, col_tile=128)
    jax.block_until_ready(loss2)
    assert jnp.allclose(loss2, ref2, atol=1e-2, rtol=1e-2), (loss2, ref2)

    # --- default (VMEM-derived) tiling path
    loss2b = simclr_loss(z_i2, z_j2, temperature=0.5)
    jax.block_until_ready(loss2b)
    assert jnp.allclose(loss2b, ref2, atol=1e-2, rtol=1e-2), (loss2b, ref2)

    # --- bf16 inputs end-to-end (bf16 MXU operands, f32 accumulation/epilogue)
    z_i3 = z_i2.astype(jnp.bfloat16)
    z_j3 = z_j2.astype(jnp.bfloat16)
    loss3 = simclr_loss(z_i3, z_j3, temperature=0.5)
    jax.block_until_ready(loss3)
    ref3 = simclr_loss_ref(z_i3, z_j3, temperature=0.5)
    assert jnp.allclose(loss3, ref3, atol=2e-2, rtol=2e-2), (loss3, ref3)

    print("KERNEL_OK")
</pallas_src>

<mosaic_0001>
module attributes {stable_mosaic.version = 11 : i64} {
  func.func @_simclr_kernel(%arg0: i32, %arg1: i32, %arg2: memref<4x32xbf16, #tpu.memory_space<vmem>>, %arg3: memref<4x32xbf16, #tpu.memory_space<vmem>>, %arg4: memref<4x32xbf16, #tpu.memory_space<vmem>>, %arg5: memref<4x32xbf16, #tpu.memory_space<vmem>>, %arg6: memref<4x1xf32, #tpu.memory_space<vmem>>, %arg7: memref<4x1xf32, #tpu.memory_space<vmem>>, %arg8: memref<4x1xf32, #tpu.memory_space<vmem>>) attributes {dimension_semantics = [#tpu.dimension_semantics<parallel>, #tpu.dimension_semantics<arbitrary>], iteration_bounds = array<i64: 1, 1>, scalar_prefetch = 0 : i64, scratch_operands = 0 : i64, tpu.core_type = #tpu.core_type<tc>, window_params = [{transform_indices = @transform_0, window_bounds = array<i64: 4, 32>}, {transform_indices = @transform_1, window_bounds = array<i64: 4, 32>}, {transform_indices = @transform_2, window_bounds = array<i64: 4, 32>}, {transform_indices = @transform_3, window_bounds = array<i64: 4, 32>}, {transform_indices = @transform_4, window_bounds = array<i64: 4, 1>}, {transform_indices = @transform_5, window_bounds = array<i64: 4, 1>}, {transform_indices = @transform_6, window_bounds = array<i64: 4, 1>}]} {
    %c0_i32 = arith.constant 0 : i32
    %0 = arith.cmpi eq, %arg1, %c0_i32 : i32
    %1 = arith.extui %0 : i1 to i32
    %c0_i32_0 = arith.constant 0 : i32
    %2 = arith.cmpi ne, %1, %c0_i32_0 : i32
    scf.if %2 {
      %cst_35 = arith.constant 0.000000e+00 : f32
      %43 = vector.broadcast %cst_35 : f32 to vector<4x1xf32>
      %c0_36 = arith.constant 0 : index
      %c0_37 = arith.constant 0 : index
      %44 = vector.load %arg7[%c0_36, %c0_37] : memref<4x1xf32, #tpu.memory_space<vmem>>, vector<4x1xf32>
      tpu.vector_store %arg7[%c0_36, %c0_37], %43 {strides = array<i32>} : memref<4x1xf32, #tpu.memory_space<vmem>>, vector<4x1xf32>,
      %cst_38 = arith.constant 0.000000e+00 : f32
      %45 = vector.broadcast %cst_38 : f32 to vector<4x1xf32>
      %c0_39 = arith.constant 0 : index
      %c0_40 = arith.constant 0 : index
      %46 = vector.load %arg8[%c0_39, %c0_40] : memref<4x1xf32, #tpu.memory_space<vmem>>, vector<4x1xf32>
      tpu.vector_store %arg8[%c0_39, %c0_40], %45 {strides = array<i32>} : memref<4x1xf32, #tpu.memory_space<vmem>>, vector<4x1xf32>,
    } else {
    }
    %c0 = arith.constant 0 : index
    %c0_1 = arith.constant 0 : index
    %3 = vector.load %arg2[%c0, %c0_1] : memref<4x32xbf16, #tpu.memory_space<vmem>>, vector<4x32xbf16>
    %c0_2 = arith.constant 0 : index
    %c0_3 = arith.constant 0 : index
    %4 = vector.load %arg4[%c0_2, %c0_3] : memref<4x32xbf16, #tpu.memory_space<vmem>>, vector<4x32xbf16>
    %cst = arith.constant dense<0.000000e+00> : vector<4x4xf32>
    %5 = tpu.matmul %3, %4, %cst {dimension_numbers = #tpu.dot_dimension_numbers<[1], [1], [0], [0], [0, 0, 1, 0], [], []>} : vector<4x32xbf16>, vector<4x32xbf16>, vector<4x4xf32> -> vector<4x4xf32>
    %c0_4 = arith.constant 0 : index
    %c0_5 = arith.constant 0 : index
    %6 = vector.load %arg2[%c0_4, %c0_5] : memref<4x32xbf16, #tpu.memory_space<vmem>>, vector<4x32xbf16>
    %c0_6 = arith.constant 0 : index
    %c0_7 = arith.constant 0 : index
    %7 = vector.load %arg5[%c0_6, %c0_7] : memref<4x32xbf16, #tpu.memory_space<vmem>>, vector<4x32xbf16>
    %cst_8 = arith.constant dense<0.000000e+00> : vector<4x4xf32>
    %8 = tpu.matmul %6, %7, %cst_8 {dimension_numbers = #tpu.dot_dimension_numbers<[1], [1], [0], [0], [0, 0, 1, 0], [], []>} : vector<4x32xbf16>, vector<4x32xbf16>, vector<4x4xf32> -> vector<4x4xf32>
    %c0_9 = arith.constant 0 : index
    %c0_10 = arith.constant 0 : index
    %9 = vector.load %arg3[%c0_9, %c0_10] : memref<4x32xbf16, #tpu.memory_space<vmem>>, vector<4x32xbf16>
    %c0_11 = arith.constant 0 : index
    %c0_12 = arith.constant 0 : index
    %10 = vector.load %arg4[%c0_11, %c0_12] : memref<4x32xbf16, #tpu.memory_space<vmem>>, vector<4x32xbf16>
    %cst_13 = arith.constant dense<0.000000e+00> : vector<4x4xf32>
    %11 = tpu.matmul %9, %10, %cst_13 {dimension_numbers = #tpu.dot_dimension_numbers<[1], [1], [0], [0], [0, 0, 1, 0], [], []>} : vector<4x32xbf16>, vector<4x32xbf16>, vector<4x4xf32> -> vector<4x4xf32>
    %c0_14 = arith.constant 0 : index
    %c0_15 = arith.constant 0 : index
    %12 = vector.load %arg3[%c0_14, %c0_15] : memref<4x32xbf16, #tpu.memory_space<vmem>>, vector<4x32xbf16>
    %c0_16 = arith.constant 0 : index
    %c0_17 = arith.constant 0 : index
    %13 = vector.load %arg5[%c0_16, %c0_17] : memref<4x32xbf16, #tpu.memory_space<vmem>>, vector<4x32xbf16>
    %cst_18 = arith.constant dense<0.000000e+00> : vector<4x4xf32>
    %14 = tpu.matmul %12, %13, %cst_18 {dimension_numbers = #tpu.dot_dimension_numbers<[1], [1], [0], [0], [0, 0, 1, 0], [], []>} : vector<4x32xbf16>, vector<4x32xbf16>, vector<4x4xf32> -> vector<4x4xf32>
    %15 = math.exp %5 : vector<4x4xf32>
    %16 = math.exp %8 : vector<4x4xf32>
    %17 = arith.addf %15, %16 : vector<4x4xf32>
    %18 = math.exp %11 : vector<4x4xf32>
    %19 = math.exp %14 : vector<4x4xf32>
    %20 = arith.addf %18, %19 : vector<4x4xf32>
    %c0_19 = arith.constant 0 : index
    %c0_20 = arith.constant 0 : index
    %21 = vector.load %arg7[%c0_19, %c0_20] : memref<4x1xf32, #tpu.memory_space<vmem>>, vector<4x1xf32>
    %cst_21 = arith.constant dense<0.000000e+00> : vector<4xf32>
    %22 = vector.multi_reduction <add>, %17, %cst_21 [1] : vector<4x4xf32> to vector<4xf32>
    %23 = vector.shape_cast %22 : vector<4xf32> to vector<4x1xf32>
    %24 = arith.addf %21, %23 : vector<4x1xf32>
    %c0_22 = arith.constant 0 : index
    %c0_23 = arith.constant 0 : index
    %25 = vector.load %arg7[%c0_22, %c0_23] : memref<4x1xf32, #tpu.memory_space<vmem>>, vector<4x1xf32>
    tpu.vector_store %arg7[%c0_22, %c0_23], %24 {strides = array<i32>} : memref<4x1xf32, #tpu.memory_space<vmem>>, vector<4x1xf32>,
    %c0_24 = arith.constant 0 : index
    %c0_25 = arith.constant 0 : index
    %26 = vector.load %arg8[%c0_24, %c0_25] : memref<4x1xf32, #tpu.memory_space<vmem>>, vector<4x1xf32>
    %cst_26 = arith.constant dense<0.000000e+00> : vector<4xf32>
    %27 = vector.multi_reduction <add>, %20, %cst_26 [1] : vector<4x4xf32> to vector<4xf32>
    %28 = vector.shape_cast %27 : vector<4xf32> to vector<4x1xf32>
    %29 = arith.addf %26, %28 : vector<4x1xf32>
    %c0_27 = arith.constant 0 : index
    %c0_28 = arith.constant 0 : index
    %30 = vector.load %arg8[%c0_27, %c0_28] : memref<4x1xf32, #tpu.memory_space<vmem>>, vector<4x1xf32>
    tpu.vector_store %arg8[%c0_27, %c0_28], %29 {strides = array<i32>} : memref<4x1xf32, #tpu.memory_space<vmem>>, vector<4x1xf32>,
    %c4_i32 = arith.constant 4 : i32
    %31 = arith.muli %arg0, %c4_i32 : i32
    %c4_i32_29 = arith.constant 4 : i32
    %32 = arith.muli %arg1, %c4_i32_29 : i32
    %c4_i32_30 = arith.constant 4 : i32
    %33 = arith.addi %32, %c4_i32_30 : i32
    %34 = arith.cmpi slt, %31, %33 : i32
    %c4_i32_31 = arith.constant 4 : i32
    %35 = arith.addi %31, %c4_i32_31 : i32
    %36 = arith.cmpi slt, %32, %35 : i32
    %37 = arith.andi %34, %36 : i1
    %38 = arith.extui %37 : i1 to i32
    %c0_i32_32 = arith.constant 0 : i32
    %39 = arith.cmpi ne, %38, %c0_i32_32 : i32
    scf.if %39 {
      %43 = tpu.iota {dimensions = array<i32: 0>} : vector<4x4xi32>
      %44 = vector.broadcast %31 : i32 to vector<4x4xi32>
      %45 = arith.addi %43, %44 : vector<4x4xi32>
      %46 = tpu.iota {dimensions = array<i32: 1>} : vector<4x4xi32>
      %47 = vector.broadcast %32 : i32 to vector<4x4xi32>
      %48 = arith.addi %46, %47 : vector<4x4xi32>
      %49 = arith.cmpi eq, %45, %48 : vector<4x4xi32>
      %c0_35 = arith.constant 0 : index
      %c0_36 = arith.constant 0 : index
      %50 = vector.load %arg7[%c0_35, %c0_36] : memref<4x1xf32, #tpu.memory_space<vmem>>, vector<4x1xf32>
      %cst_37 = arith.constant 0.000000e+00 : f32
      %51 = vector.broadcast %cst_37 : f32 to vector<4x4xf32>
      %52 = arith.select %49, %17, %51 : vector<4x4xi1>, vector<4x4xf32>
      %cst_38 = arith.constant dense<0.000000e+00> : vector<4xf32>
      %53 = vector.multi_reduction <add>, %52, %cst_38 [1] : vector<4x4xf32> to vector<4xf32>
      %54 = vector.shape_cast %53 : vector<4xf32> to vector<4x1xf32>
      %55 = arith.subf %50, %54 : vector<4x1xf32>
      %c0_39 = arith.constant 0 : index
      %c0_40 = arith.constant 0 : index
      %56 = vector.load %arg7[%c0_39, %c0_40] : memref<4x1xf32, #tpu.memory_space<vmem>>, vector<4x1xf32>
      tpu.vector_store %arg7[%c0_39, %c0_40], %55 {strides = array<i32>} : memref<4x1xf32, #tpu.memory_space<vmem>>, vector<4x1xf32>,
      %c0_41 = arith.constant 0 : index
      %c0_42 = arith.constant 0 : index
      %57 = vector.load %arg8[%c0_41, %c0_42] : memref<4x1xf32, #tpu.memory_space<vmem>>, vector<4x1xf32>
      %cst_43 = arith.constant 0.000000e+00 : f32
      %58 = vector.broadcast %cst_43 : f32 to vector<4x4xf32>
      %59 = arith.select %49, %20, %58 : vector<4x4xi1>, vector<4x4xf32>
      %cst_44 = arith.constant dense<0.000000e+00> : vector<4xf32>
      %60 = vector.multi_reduction <add>, %59, %cst_44 [1] : vector<4x4xf32> to vector<4xf32>
      %61 = vector.shape_cast %60 : vector<4xf32> to vector<4x1xf32>
      %62 = arith.subf %57, %61 : vector<4x1xf32>
      %c0_45 = arith.constant 0 : index
      %c0_46 = arith.constant 0 : index
      %63 = vector.load %arg8[%c0_45, %c0_46] : memref<4x1xf32, #tpu.memory_space<vmem>>, vector<4x1xf32>
      tpu.vector_store %arg8[%c0_45, %c0_46], %62 {strides = array<i32>} : memref<4x1xf32, #tpu.memory_space<vmem>>, vector<4x1xf32>,
    } else {
    }
    %c0_i32_33 = arith.constant 0 : i32
    %40 = arith.cmpi eq, %arg1, %c0_i32_33 : i32
    %41 = arith.extui %40 : i1 to i32
    %c0_i32_34 = arith.constant 0 : i32
    %42 = arith.cmpi ne, %41, %c0_i32_34 : i32
    scf.if %42 {
      %c0_35 = arith.constant 0 : index
      %c0_36 = arith.constant 0 : index
      %43 = vector.load %arg6[%c0_35, %c0_36] : memref<4x1xf32, #tpu.memory_space<vmem>>, vector<4x1xf32>
      %c0_37 = arith.constant 0 : index
      %c0_38 = arith.constant 0 : index
      %44 = vector.load %arg7[%c0_37, %c0_38] : memref<4x1xf32, #tpu.memory_space<vmem>>, vector<4x1xf32>
      %cst_39 = arith.constant 9.99999974E-6 : f32
      %45 = vector.broadcast %cst_39 : f32 to vector<4x1xf32>
      %46 = arith.addf %44, %45 : vector<4x1xf32>
      %47 = math.log %46 : vector<4x1xf32>
      %48 = arith.subf %47, %43 : vector<4x1xf32>
      %c0_40 = arith.constant 0 : index
      %c0_41 = arith.constant 0 : index
      %49 = vector.load %arg7[%c0_40, %c0_41] : memref<4x1xf32, #tpu.memory_space<vmem>>, vector<4x1xf32>
      tpu.vector_store %arg7[%c0_40, %c0_41], %48 {strides = array<i32>} : memref<4x1xf32, #tpu.memory_space<vmem>>, vector<4x1xf32>,
      %c0_42 = arith.constant 0 : index
      %c0_43 = arith.constant 0 : index
      %50 = vector.load %arg8[%c0_42, %c0_43] : memref<4x1xf32, #tpu.memory_space<vmem>>, vector<4x1xf32>
      %cst_44 = arith.constant 9.99999974E-6 : f32
      %51 = vector.broadcast %cst_44 : f32 to vector<4x1xf32>
      %52 = arith.addf %50, %51 : vector<4x1xf32>
      %53 = math.log %52 : vector<4x1xf32>
      %54 = arith.subf %53, %43 : vector<4x1xf32>
      %c0_45 = arith.constant 0 : index
      %c0_46 = arith.constant 0 : index
      %55 = vector.load %arg8[%c0_45, %c0_46] : memref<4x1xf32, #tpu.memory_space<vmem>>, vector<4x1xf32>
      tpu.vector_store %arg8[%c0_45, %c0_46], %54 {strides = array<i32>} : memref<4x1xf32, #tpu.memory_space<vmem>>, vector<4x1xf32>,
    } else {
    }
    return
  }
  func.func @transform_0(%arg0: i32, %arg1: i32) -> (i32, i32) {
    %c0_i32 = arith.constant 0 : i32
    %c0_i32_0 = arith.constant 0 : i32
    return %arg0, %c0_i32 : i32, i32
  }
  func.func @transform_1(%arg0: i32, %arg1: i32) -> (i32, i32) {
    %c0_i32 = arith.constant 0 : i32
    %c0_i32_0 = arith.constant 0 : i32
    return %arg0, %c0_i32 : i32, i32
  }
  func.func @transform_2(%arg0: i32, %arg1: i32) -> (i32, i32) {
    %c0_i32 = arith.constant 0 : i32
    %c0_i32_0 = arith.constant 0 : i32
    return %arg1, %c0_i32 : i32, i32
  }
  func.func @transform_3(%arg0: i32, %arg1: i32) -> (i32, i32) {
    %c0_i32 = arith.constant 0 : i32
    %c0_i32_0 = arith.constant 0 : i32
    return %arg1, %c0_i32 : i32, i32
  }
  func.func @transform_4(%arg0: i32, %arg1: i32) -> (i32, i32) {
    %c0_i32 = arith.constant 0 : i32
    %c0_i32_0 = arith.constant 0 : i32
    return %arg0, %c0_i32 : i32, i32
  }
  func.func @transform_5(%arg0: i32, %arg1: i32) -> (i32, i32) {
    %c0_i32 = arith.constant 0 : i32
    %c0_i32_0 = arith.constant 0 : i32
    return %arg0, %c0_i32 : i32, i32
  }
  func.func @transform_6(%arg0: i32, %arg1: i32) -> (i32, i32) {
    %c0_i32 = arith.constant 0 : i32
    %c0_i32_0 = arith.constant 0 : i32
    return %arg0, %c0_i32 : i32, i32
  }
}

</mosaic_0001>

<llo_original>
// kernel: tpu_custom_call.1
$region0: #{tpu_custom_call.1}
  #allocation0 [shape = 'u32[]', space=smem, size = 0x4, offset = 0x4, fixed_abs, tag = 'smem constant byte address 0x4 - core index']
  #allocation1 [shape = 'u32[72,128]{1,0:T(1,128)}', space=vmem, size = 0x9000, scoped, tag = 'internal scratch']
  %s0 = inlined_call_operand.vmem [shape: bf16[4,32], index: 0, kind: input, shape index: {}]
  %s1 = inlined_call_operand.vmem [shape: bf16[4,32], index: 1, kind: input, shape index: {}]
  %s2 = inlined_call_operand.hbm [shape: bf16[4,32], index: 2, kind: input, shape index: {}]
  %s3 = inlined_call_operand.hbm [shape: bf16[4,32], index: 3, kind: input, shape index: {}]
  %s4 = inlined_call_operand.vmem [shape: f32[4,1], index: 4, kind: input, shape index: {}]
  %s5 = inlined_call_operand.vmem [shape: f32[4,1], index: 5, kind: output, shape index: {0}]
  %s6 = inlined_call_operand.vmem [shape: f32[4,1], index: 6, kind: output, shape index: {1}]
  %7 = xla_tuple %s5, %s6
  %s8 = sld [smem:[#allocation0]]
  $region58: #{tpu_custom_call.1} parent=0
    _
  %s10 = ssub.s32 1, %s8
  %s11 = scalar_select 0, %s10, %s8
  $region1: #{tpu_custom_call.1} parent=0
    #allocation2 [shape = 'u8[1024]{0}', space=vmem, size = 0x400, scoped, tag = 'input window, operand 2, single buffered']
    #allocation3 [shape = 's32[1]{0}', space=sflag, size = 0x4, scoped, tag = 'scoped memory for tpu_custom_call.1']
    #allocation4 [shape = 'u8[1024]{0}', space=vmem, size = 0x400, scoped, tag = 'input window, operand 3, single buffered']
    #allocation5 [shape = 's32[1]{0}', space=sflag, size = 0x4, scoped, tag = 'scoped memory for tpu_custom_call.1']
    %12 = vsyncpa [#allocation3], 0
    %13 = vsyncpa [#allocation5], 0
    // Predicated region
    $region2: #{tpu_custom_call.1} parent=1 // pred_check
      _
    $region3: #{tpu_custom_call.1} parent=1 // pred_check_branch
      %15 = sbr.rel (0) target = $region5
    $region4: #{tpu_custom_call.1} parent=1 // pred_region
      _
    $region5: #{tpu_custom_call.1} parent=1 // pred_fallthru
      _
    // Predicated region
    $region6: #{tpu_custom_call.1} parent=1 // pred_check
      _
    $region7: #{tpu_custom_call.1} parent=1 // pred_check_branch
      %17 = sbr.rel (0) target = $region9
    $region8: #{tpu_custom_call.1} parent=1 // pred_region
      _
    $region9: #{tpu_custom_call.1} parent=1 // pred_fallthru
      _
    // Predicated region
    $region10: #{tpu_custom_call.1} parent=1 // pred_check
      _
    $region11: #{tpu_custom_call.1} parent=1 // pred_check_branch
      %19 = sbr.rel (0) target = $region13
    $region12: #{tpu_custom_call.1} parent=1 // pred_region
      %21 = vsyncadd [#allocation3], 0
      %s23 = sshll.u32 %s2, 4
      %s24 = int_to_ptr.hbm [resolvable:$true] %s23
      %s25 = sshll.u32 [#allocation2], 4
      %s26 = int_to_ptr.vmem [resolvable:$true] %s25
      %28 = dma.hbm_to_vmem [thread:$0]  %s24, 32, %s26, [#allocation3]
    $region13: #{tpu_custom_call.1} parent=1 // pred_fallthru
      _
    // Predicated region
    $region14: #{tpu_custom_call.1} parent=1 // pred_check
      _
    $region15: #{tpu_custom_call.1} parent=1 // pred_check_branch
      %30 = sbr.rel (0) target = $region17
    $region16: #{tpu_custom_call.1} parent=1 // pred_region
      %32 = vsyncadd [#allocation5], 0
      %s34 = sshll.u32 %s3, 4
      %s35 = int_to_ptr.hbm [resolvable:$true] %s34
      %s36 = sshll.u32 [#allocation4], 4
      %s37 = int_to_ptr.vmem [resolvable:$true] %s36
      %39 = dma.hbm_to_vmem [thread:$0]  %s35, 32, %s37, [#allocation5]
    $region17: #{tpu_custom_call.1} parent=1 // pred_fallthru
      _
    // Predicated region
    $region18: #{tpu_custom_call.1} parent=1 // pred_check
      _
    $region19: #{tpu_custom_call.1} parent=1 // pred_check_branch
      %41 = sbr.rel (0) target = $region21
    $region20: #{tpu_custom_call.1} parent=1 // pred_region
      _
    $region21: #{tpu_custom_call.1} parent=1 // pred_fallthru
      _
    // Predicated region
    $region22: #{tpu_custom_call.1} parent=1 // pred_check
      _
    $region23: #{tpu_custom_call.1} parent=1 // pred_check_branch
      %43 = sbr.rel (0) target = $region25
    $region24: #{tpu_custom_call.1} parent=1 // pred_region
      %45 = dma.done [#allocation3], 32
    $region25: #{tpu_custom_call.1} parent=1 // pred_fallthru
      _
    // Predicated region
    $region26: #{tpu_custom_call.1} parent=1 // pred_check
      _
    $region27: #{tpu_custom_call.1} parent=1 // pred_check_branch
      %47 = sbr.rel (0) target = $region29
    $region28: #{tpu_custom_call.1} parent=1 // pred_region
      %49 = dma.done [#allocation5], 32
    $region29: #{tpu_custom_call.1} parent=1 // pred_fallthru
      _
    %p51 = scmp.eq.s32.totalorder 0, 0
    // Predicated region
    $region30: #{tpu_custom_call.1} parent=1 // pred_check
      %p52 = pneg %p51
    $region31: #{tpu_custom_call.1} parent=1 // pred_check_branch
      %54 = sbr.rel (%p52) target = $region33
    $region32: #{tpu_custom_call.1} parent=1 // pred_region
      %vm55 = vcmask 3072
      %56 = vst.msk [vmem:[%s5] sm:$0xf] %vm55, 0.0
      %57 = vst.msk [vmem:[%s6] sm:$0xf] %vm55, 0.0
    $region33: #{tpu_custom_call.1} parent=1 // pred_fallthru
      _
    %v58 = vld [vmem:[%s0] sm:$0x3]
    %v59 = vld [vmem:[#allocation2] sm:$0x3]
    %vm60 = vcmask 261120
    %v62 = vsel %vm60, %v58, 0
    %v65 = vsel %vm60, %v59, 0
    %67 = vmatpush.bf16.xpose.msra.mxu0 0
    %68 = vmatpush.bf16.xpose.msra.mxu0 0
    %69 = vmatpush.bf16.xpose.msra.mxu0 0
    %70 = vmatpush.bf16.xpose.msra.mxu0 0
    %71 = vmatpush.bf16.xpose.msra.mxu0 0
    %72 = vmatpush.bf16.xpose.msra.mxu0 0
    %73 = vmatpush.bf16.xpose.msra.mxu0 0
    %74 = vmatpush.bf16.xpose.msra.mxu0 %v65
    %75 = vmatmul.bf16.gmra.mxu0 %v62
    %v76 = vpop.f32.mrf.mxu0
    %v77 = vadd.f32 0.0, %v76
    %v78 = vpop.f32.mrf.mxu0
    %79 = vdwg.mxu0
    %v80 = vld [vmem:[#allocation4] sm:$0x3]
    %v82 = vsel %vm60, %v80, 0
    %84 = vmatpush.bf16.xpose.msra.mxu0 0
    %85 = vmatpush.bf16.xpose.msra.mxu0 0
    %86 = vmatpush.bf16.xpose.msra.mxu0 0
    %87 = vmatpush.bf16.xpose.msra.mxu0 0
    %88 = vmatpush.bf16.xpose.msra.mxu0 0
    %89 = vmatpush.bf16.xpose.msra.mxu0 0
    %90 = vmatpush.bf16.xpose.msra.mxu0 0
    %91 = vmatpush.bf16.xpose.msra.mxu0 %v82
    %92 = vmatmul.bf16.gmra.mxu0 %v62
    %v93 = vpop.f32.mrf.mxu0
    %v94 = vadd.f32 0.0, %v93
    %v95 = vpop.f32.mrf.mxu0
    %96 = vdwg.mxu0
    %v97 = vld [vmem:[%s1] sm:$0x3]
    %v99 = vsel %vm60, %v97, 0
    %101 = vmatpush.bf16.xpose.msra.mxu0 0
    %102 = vmatpush.bf16.xpose.msra.mxu0 0
    %103 = vmatpush.bf16.xpose.msra.mxu0 0
    %104 = vmatpush.bf16.xpose.msra.mxu0 0
    %105 = vmatpush.bf16.xpose.msra.mxu0 0
    %106 = vmatpush.bf16.xpose.msra.mxu0 0
    %107 = vmatpush.bf16.xpose.msra.mxu0 0
    %108 = vmatpush.bf16.xpose.msra.mxu0 %v65
    %109 = vmatmul.bf16.gmra.mxu0 %v99
    %v110 = vpop.f32.mrf.mxu0
    %v111 = vadd.f32 0.0, %v110
    %v112 = vpop.f32.mrf.mxu0
    %113 = vdwg.mxu0
    %114 = vmatpush.bf16.xpose.msra.mxu0 0
    %115 = vmatpush.bf16.xpose.msra.mxu0 0
    %116 = vmatpush.bf16.xpose.msra.mxu0 0
    %117 = vmatpush.bf16.xpose.msra.mxu0 0
    %118 = vmatpush.bf16.xpose.msra.mxu0 0
    %119 = vmatpush.bf16.xpose.msra.mxu0 0
    %120 = vmatpush.bf16.xpose.msra.mxu0 0
    %121 = vmatpush.bf16.xpose.msra.mxu0 %v82
    %122 = vmatmul.bf16.gmra.mxu0 %v99
    %v123 = vpop.f32.mrf.mxu0
    %v124 = vadd.f32 0.0, %v123
    %v125 = vpop.f32.mrf.mxu0
    %126 = vdwg.mxu0
    %v127 = vmul.f32 %v77, 1.442695
    %v128 = vpow.pop %v127
    %v129 = vmul.f32 %v94, 1.442695
    %v130 = vpow.pop %v129
    %v131 = vadd.f32 %v128, %v130
    %v132 = vmul.f32 %v111, 1.442695
    %v133 = vpow.pop %v132
    %v134 = vmul.f32 %v124, 1.442695
    %v135 = vpow.pop %v134
    %v136 = vadd.f32 %v133, %v135
    %v137 = vld [vmem:[%s5] sm:$0xf]
    %vm138 = vcmask 27648
    %v139 = vsel %vm138, %v131, 0.0
    %140 = vadd.xlane.f32.xlu0 %v139
    %v141 = vpop.xlane.xlu0 %140
    %v142 = vadd.f32 %v137, %v141
    %vm143 = vcmask 3072
    %144 = vst.msk [vmem:[%s5] sm:$0xf] %vm143, %v142
    %v145 = vld [vmem:[%s6] sm:$0xf]
    %v146 = vsel %vm138, %v136, 0.0
    %147 = vadd.xlane.f32.xlu0 %v146
    %v148 = vpop.xlane.xlu0 %147
    %v149 = vadd.f32 %v145, %v148
    %150 = vst.msk [vmem:[%s6] sm:$0xf] %vm143, %v149
    %s151 = smul.u32 0, 4
    %s152 = smul.u32 0, 4
    %s153 = sadd.s32 %s152, 4
    %p154 = scmp.lt.s32.totalorder %s151, %s153
    %s155 = sadd.s32 %s151, 4
    %p156 = scmp.lt.s32.totalorder %s152, %s155
    %p157 = pnand %p154, %p156
    %p158 = pneg %p157
    // Predicated region
    $region34: #{tpu_custom_call.1} parent=1 // pred_check
      _
    $region35: #{tpu_custom_call.1} parent=1 // pred_check_branch
      %160 = sbr.rel (%p157) target = $region37
    $region36: #{tpu_custom_call.1} parent=1 // pred_region
      %v161 = vlaneseq
      %v162 = vshrl.u32 %v161, 7
      %v163 = vstv %s151
      %v164 = vadd.s32 %v162, %v163
      %v165 = vlaneseq
      %v166 = vand.u32 %v165, 127
      %v167 = vstv %s152
      %v168 = vadd.s32 %v166, %v167
      %vm169 = vcmp.eq.s32.totalorder %v164, %v168
      %v170 = vld [vmem:[%s5] sm:$0xf]
      %v171 = vsel %vm169, %v131, 0.0
      %v172 = vsel %vm138, %v171, 0.0
      %173 = vadd.xlane.f32.xlu0 %v172
      %v174 = vpop.xlane.xlu0 %173
      %v175 = vsub.f32 %v170, %v174
      %176 = vst.msk [vmem:[%s5] sm:$0xf] %vm143, %v175
      %v177 = vld [vmem:[%s6] sm:$0xf]
      %v178 = vsel %vm169, %v136, 0.0
      %v179 = vsel %vm138, %v178, 0.0
      %180 = vadd.xlane.f32.xlu0 %v179
      %v181 = vpop.xlane.xlu0 %180
      %v182 = vsub.f32 %v177, %v181
      %183 = vst.msk [vmem:[%s6] sm:$0xf] %vm143, %v182
    $region37: #{tpu_custom_call.1} parent=1 // pred_fallthru
      _
    // Predicated region
    $region38: #{tpu_custom_call.1} parent=1 // pred_check
      %p184 = pneg %p51
    $region39: #{tpu_custom_call.1} parent=1 // pred_check_branch
      %186 = sbr.rel (%p184) target = $region41
    $region40: #{tpu_custom_call.1} parent=1 // pred_region
      %v187 = vld [vmem:[%s4] sm:$0xf]
      %v188 = vld [vmem:[%s5] sm:$0xf]
      %v189 = vadd.f32 %v188, 1e-05
      %v190 = vlog2.pop %v189
      %v191 = vmul.f32 %v190, 0.6931472
      %v192 = vsub.f32 %v191, %v187
      %193 = vst.msk [vmem:[%s5] sm:$0xf] %vm143, %v192
      %v194 = vld [vmem:[%s6] sm:$0xf]
      %v195 = vadd.f32 %v194, 1e-05
      %v196 = vlog2.pop %v195
      %v197 = vmul.f32 %v196, 0.6931472
      %v198 = vsub.f32 %v197, %v187
      %199 = vst.msk [vmem:[%s6] sm:$0xf] %vm143, %v198
    $region41: #{tpu_custom_call.1} parent=1 // pred_fallthru
      _
    // Predicated region
    $region42: #{tpu_custom_call.1} parent=1 // pred_check
      _
    $region43: #{tpu_custom_call.1} parent=1 // pred_check_branch
      %201 = sbr.rel (0) target = $region45
    $region44: #{tpu_custom_call.1} parent=1 // pred_region
      _
    $region45: #{tpu_custom_call.1} parent=1 // pred_fallthru
      _
    // Predicated region
    $region46: #{tpu_custom_call.1} parent=1 // pred_check
      _
    $region47: #{tpu_custom_call.1} parent=1 // pred_check_branch
      %203 = sbr.rel (0) target = $region49
    $region48: #{tpu_custom_call.1} parent=1 // pred_region
      _
    $region49: #{tpu_custom_call.1} parent=1 // pred_fallthru
      _
    // Predicated region
    $region50: #{tpu_custom_call.1} parent=1 // pred_check
      _
    $region51: #{tpu_custom_call.1} parent=1 // pred_check_branch
      %205 = sbr.rel (0) target = $region53
    $region52: #{tpu_custom_call.1} parent=1 // pred_region
      _
    $region53: #{tpu_custom_call.1} parent=1 // pred_fallthru
      _
    // Predicated region
    $region54: #{tpu_custom_call.1} parent=1 // pred_check
      _
    $region55: #{tpu_custom_call.1} parent=1 // pred_check_branch
      %207 = sbr.rel (0) target = $region57
    $region56: #{tpu_custom_call.1} parent=1 // pred_region
      _
    $region57: #{tpu_custom_call.1} parent=1 // pred_fallthru
      _
    %208 = vsyncpa [#allocation3], 1
    %209 = vsyncpa [#allocation5], 1

</llo_original>
